<compile_context>
chip_gen: v7x
topology: tpu7x:2x2x1
jax: 0.10.0
libtpu: 0.0.40
codegen_flags: <defaults>
</compile_context>

<pallas_src>
import functools

import jax
import jax.numpy as jnp
from jax.experimental import pallas as pl
from jax.experimental.pallas import tpu as pltpu

NUM_CLASSES = 101
C_PAD = 128          # class (contraction) dim padded to the full 128-lane width
OUT_DIM = 128
MIN_GRID_STEPS = 4   # keep >=4 grid steps on large batches (2 TCs on v7x x 2)


def _round_up(n, m):
    return ((n + m - 1) // m) * m


def _mod_net_kernel(x_ref, w_ref, o_ref, *, k: int):
    # x_ref: (TB, K) int32 indices
    # w_ref: (C_PAD, OUT_DIM) bf16, rows >= NUM_CLASSES are zero (VMEM-resident)
    # o_ref: (TB, OUT_DIM)
    tb = x_ref.shape[0]
    idx = x_ref[...]                                              # (TB, K)
    col = jax.lax.broadcasted_iota(jnp.int32, (tb, C_PAD), 1)     # hoisted once

    # Multi-hot build: unrolled K loop (K is small) of (TB, C_PAD) VPU compares,
    # OR-accumulated as bool, single cast at the end. Duplicates handled by OR.
    hot = idx[:, 0:1] == col
    for j in range(1, k):
        hot = jnp.logical_or(hot, idx[:, j : j + 1] == col)
    z = hot.astype(jnp.bfloat16)                                  # exact 0/1 in bf16

    # (TB, 128) bf16 @ (128, 128) bf16 on the MXU with f32 accumulation.
    y = jnp.dot(z, w_ref[...], preferred_element_type=jnp.float32)

    # Exact sigmoid via tanh: single EUP push per element, mul/add on the VPU.
    o_ref[...] = (0.5 + 0.5 * jnp.tanh(0.5 * y)).astype(o_ref.dtype)


def mod_net_forward(x_idx, w_t, *, block_b=4096, out_dtype=jnp.float32):
    """x_idx: (B, K) int indices into [0, 101). w_t: (101, 128) f32 (W transposed)."""
    x_idx = x_idx.astype(jnp.int32)
    B, K = x_idx.shape
    assert w_t.shape == (NUM_CLASSES, OUT_DIM)

    # Zero-pad the class (contraction) dim 101 -> 128 and store as bf16 for the
    # MXU (z is exactly 0/1 in bf16; bf16 weight error ~1e-3 relative).
    w_pad = (
        jnp.zeros((C_PAD, OUT_DIM), jnp.float32)
        .at[:NUM_CLASSES, :]
        .set(w_t.astype(jnp.float32))
        .astype(jnp.bfloat16)
    )

    # Batch tile: multiple of 8 sublanes, capped at block_b. For large batches,
    # also cap so the grid keeps >= MIN_GRID_STEPS steps (megacore sharding on
    # v7x) -- but never drop below ~1024 rows where per-step overhead dominates.
    tb = min(block_b, _round_up(max(B, 1), 8))
    if B > MIN_GRID_STEPS * 1024:
        tb = min(tb, _round_up(pl.cdiv(B, MIN_GRID_STEPS), 8))
    grid = (pl.cdiv(B, tb),)

    out_bytes = jnp.dtype(out_dtype).itemsize
    cost = pl.CostEstimate(
        flops=2 * B * C_PAD * OUT_DIM,
        transcendentals=B * OUT_DIM,  # one tanh per output element
        bytes_accessed=B * (4 * K + out_bytes * OUT_DIM) + 2 * C_PAD * OUT_DIM,
    )

    # TODO(synk): verify via xprof that "parallel" actually shards the batch
    # axis across the 2 TensorCores on v7x; if not, switch to CORE_PARALLEL.
    return pl.pallas_call(
        functools.partial(_mod_net_kernel, k=K),
        out_shape=jax.ShapeDtypeStruct((B, OUT_DIM), out_dtype),
        grid=grid,
        in_specs=[
            pl.BlockSpec((tb, K), lambda i: (i, 0)),
            # Constant block index -> weight stays resident, not re-DMA'd per step.
            pl.BlockSpec((C_PAD, OUT_DIM), lambda i: (0, 0)),
        ],
        out_specs=pl.BlockSpec((tb, OUT_DIM), lambda i: (i, 0)),
        compiler_params=pltpu.CompilerParams(dimension_semantics=("parallel",)),
        cost_estimate=cost,
    )(x_idx, w_pad)


def init_params(key):
    # nn.Linear(101, 128, bias=False) default init: U(-1/sqrt(101), 1/sqrt(101));
    # stored transposed as (in=101, out=128).
    bound = 1.0 / jnp.sqrt(jnp.float32(NUM_CLASSES))
    w = jax.random.uniform(
        key, (OUT_DIM, NUM_CLASSES), jnp.float32, minval=-bound, maxval=bound
    )
    return w.T  # (101, 128)


def mod_net_ref(x_idx, w_t):
    """Pure-JAX reference with identical semantics (exact sigmoid, f32 weights)."""
    one_hot = x_idx[:, :, None] == jnp.arange(NUM_CLASSES)[None, None, :]
    z = jnp.any(one_hot, axis=1).astype(jnp.float32)
    return jax.nn.sigmoid(z @ w_t)


if __name__ == "__main__":
    key = jax.random.PRNGKey(0)
    k_w, k_x1, k_x2 = jax.random.split(key, 3)

    w_t = init_params(k_w)

    # Small example: batch=2, each sample selects K=3 class indices (multi-hot),
    # matching z[i, x[i]] = 1 in the PyTorch forward.
    x_small = jax.random.randint(k_x1, (2, 3), 0, NUM_CLASSES, dtype=jnp.int32)
    y_small = jax.block_until_ready(mod_net_forward(x_small, w_t))
    assert y_small.shape == (2, OUT_DIM)
    # Sigmoid is now exact; remaining error is only the bf16 weight cast.
    assert jnp.allclose(y_small, mod_net_ref(x_small, w_t), atol=1e-3, rtol=1e-3), (
        "mismatch vs reference (small batch)"
    )

    # Second check exercising multiple grid steps + a partial tail block.
    x_big = jax.random.randint(k_x2, (530, 3), 0, NUM_CLASSES, dtype=jnp.int32)
    y_big = jax.block_until_ready(mod_net_forward(x_big, w_t, block_b=256))
    assert y_big.shape == (530, OUT_DIM)
    assert jnp.allclose(y_big, mod_net_ref(x_big, w_t), atol=1e-3, rtol=1e-3), (
        "mismatch vs reference (tiled batch)"
    )

    print("KERNEL_OK")
</pallas_src>

<mosaic_0001>
module attributes {stable_mosaic.version = 11 : i64} {
  func.func @_mod_net_kernel(%arg0: i32, %arg1: memref<8x3xi32, #tpu.memory_space<vmem>>, %arg2: memref<128x128xbf16, #tpu.memory_space<vmem>>, %arg3: memref<8x128xf32, #tpu.memory_space<vmem>>) attributes {dimension_semantics = [#tpu.dimension_semantics<parallel>], iteration_bounds = array<i64: 1>, scalar_prefetch = 0 : i64, scratch_operands = 0 : i64, tpu.core_type = #tpu.core_type<tc>, window_params = [{transform_indices = @transform_0, window_bounds = array<i64: 8, 3>}, {pipeline_mode = #tpu.pipeline_mode<synchronous>, transform_indices = @transform_1, window_bounds = array<i64: 128, 128>}, {transform_indices = @transform_2, window_bounds = array<i64: 8, 128>}]} {
    %c0 = arith.constant 0 : index
    %c0_0 = arith.constant 0 : index
    %0 = vector.load %arg1[%c0, %c0_0] : memref<8x3xi32, #tpu.memory_space<vmem>>, vector<8x3xi32>
    %1 = tpu.iota {dimensions = array<i32: 1>} : vector<8x128xi32>
    %2 = vector.extract_strided_slice %0 {offsets = [0, 0], sizes = [8, 1], strides = [1, 1]} : vector<8x3xi32> to vector<8x1xi32>
    %3 = vector.broadcast %2 : vector<8x1xi32> to vector<8x128xi32>
    %4 = arith.cmpi eq, %3, %1 : vector<8x128xi32>
    %5 = vector.extract_strided_slice %0 {offsets = [0, 1], sizes = [8, 1], strides = [1, 1]} : vector<8x3xi32> to vector<8x1xi32>
    %6 = vector.broadcast %5 : vector<8x1xi32> to vector<8x128xi32>
    %7 = arith.cmpi eq, %6, %1 : vector<8x128xi32>
    %8 = arith.ori %4, %7 : vector<8x128xi1>
    %9 = vector.extract_strided_slice %0 {offsets = [0, 2], sizes = [8, 1], strides = [1, 1]} : vector<8x3xi32> to vector<8x1xi32>
    %10 = vector.broadcast %9 : vector<8x1xi32> to vector<8x128xi32>
    %11 = arith.cmpi eq, %10, %1 : vector<8x128xi32>
    %12 = arith.ori %8, %11 : vector<8x128xi1>
    %13 = arith.extui %12 : vector<8x128xi1> to vector<8x128xi32>
    %14 = arith.sitofp %13 : vector<8x128xi32> to vector<8x128xf32>
    %15 = arith.truncf %14 : vector<8x128xf32> to vector<8x128xbf16>
    %c0_1 = arith.constant 0 : index
    %c0_2 = arith.constant 0 : index
    %16 = vector.load %arg2[%c0_1, %c0_2] : memref<128x128xbf16, #tpu.memory_space<vmem>>, vector<128x128xbf16>
    %cst = arith.constant dense<0.000000e+00> : vector<8x128xf32>
    %17 = tpu.matmul %15, %16, %cst {dimension_numbers = #tpu.dot_dimension_numbers<[1], [0], [0], [1], [0, 0, 1, 1], [], []>} : vector<8x128xbf16>, vector<128x128xbf16>, vector<8x128xf32> -> vector<8x128xf32>
    %cst_3 = arith.constant 5.000000e-01 : f32
    %18 = vector.broadcast %cst_3 : f32 to vector<8x128xf32>
    %19 = arith.mulf %18, %17 : vector<8x128xf32>
    %20 = math.tanh %19 : vector<8x128xf32>
    %cst_4 = arith.constant 5.000000e-01 : f32
    %21 = vector.broadcast %cst_4 : f32 to vector<8x128xf32>
    %22 = arith.mulf %21, %20 : vector<8x128xf32>
    %cst_5 = arith.constant 5.000000e-01 : f32
    %23 = vector.broadcast %cst_5 : f32 to vector<8x128xf32>
    %24 = arith.addf %23, %22 : vector<8x128xf32>
    %c0_6 = arith.constant 0 : index
    %c0_7 = arith.constant 0 : index
    %25 = vector.load %arg3[%c0_6, %c0_7] : memref<8x128xf32, #tpu.memory_space<vmem>>, vector<8x128xf32>
    tpu.vector_store %arg3[%c0_6, %c0_7], %24 {strides = array<i32>} : memref<8x128xf32, #tpu.memory_space<vmem>>, vector<8x128xf32>,
    return
  }
  func.func @transform_0(%arg0: i32) -> (i32, i32) {
    %c0_i32 = arith.constant 0 : i32
    %c0_i32_0 = arith.constant 0 : i32
    return %arg0, %c0_i32 : i32, i32
  }
  func.func @transform_1(%arg0: i32) -> (i32, i32) {
    %c0_i32 = arith.constant 0 : i32
    %c0_i32_0 = arith.constant 0 : i32
    %c0_i32_1 = arith.constant 0 : i32
    return %c0_i32, %c0_i32_0 : i32, i32
  }
  func.func @transform_2(%arg0: i32) -> (i32, i32) {
    %c0_i32 = arith.constant 0 : i32
    %c0_i32_0 = arith.constant 0 : i32
    return %arg0, %c0_i32 : i32, i32
  }
}

</mosaic_0001>

<llo_original>
// kernel: tpu_custom_call.1
$region0: #{tpu_custom_call.1}
  #allocation0 [shape = 'u32[]', space=smem, size = 0x4, offset = 0x4, fixed_abs, tag = 'smem constant byte address 0x4 - core index']
  #allocation1 [shape = 'u32[144,128]{1,0:T(1,128)}', space=vmem, size = 0x12000, scoped, tag = 'internal scratch']
  %s0 = inlined_call_operand.hbm [shape: s32[2,3], index: 0, kind: input, shape index: {}]
  %s1 = inlined_call_operand.hbm [shape: bf16[128,128], index: 1, kind: input, shape index: {}]
  %s2 = inlined_call_operand.hbm [shape: f32[2,128], index: 2, kind: output, shape index: {}]
  %s3 = sld [smem:[#allocation0]]
  $region26: #{tpu_custom_call.1} parent=0
    _
  %s5 = ssub.s32 1, %s3
  %s6 = scalar_select 0, %s5, %s3
  $region1: #{tpu_custom_call.1} parent=0
    #allocation2 [shape = 'u8[4096]{0}', space=vmem, size = 0x1000, scoped, tag = 'input window, operand 0, single buffered']
    #allocation3 [shape = 's32[1]{0}', space=sflag, size = 0x4, scoped, tag = 'scoped memory for tpu_custom_call.1']
    #allocation4 [shape = 's32[1]{0}', space=sflag, size = 0x4, scoped, tag = 'scoped memory for tpu_custom_call.1']
    #allocation5 [shape = 'u8[32768]{0}', space=vmem, size = 0x8000, scoped, tag = 'input window, operand 1, single buffered']
    #allocation6 [shape = 's32[1]{0}', space=sflag, size = 0x4, scoped, tag = 'scoped memory for tpu_custom_call.1']
    #allocation7 [shape = 'u8[4096]{0}', space=vmem, size = 0x1000, scoped, tag = 'output window, operand 0, single buffered']
    %7 = vsyncpa [#allocation3], 0
    %8 = vsyncpa [#allocation6], 0
    %9 = vsyncpa [#allocation4], 0
    // Predicated region
    $region2: #{tpu_custom_call.1} parent=1 // pred_check
      _
    $region3: #{tpu_custom_call.1} parent=1 // pred_check_branch
      %11 = sbr.rel (0) target = $region5
    $region4: #{tpu_custom_call.1} parent=1 // pred_region
      %s13 = ssub.s32 128, 32
      %14 = vsyncadd [#allocation3], %s13
      %s15 = sshll.u32 [#allocation2], 4
      %s16 = int_to_ptr.vmem [resolvable:$true] %s15
      %21 = dma.hbm_to_vmem [thread:$0]  %s0, 32, %s16, [#allocation3], 32, 32, 2
    $region5: #{tpu_custom_call.1} parent=1 // pred_fallthru
      _
    // Predicated region
    $region6: #{tpu_custom_call.1} parent=1 // pred_check
      _
    $region7: #{tpu_custom_call.1} parent=1 // pred_check_branch
      %23 = sbr.rel (0) target = $region9
    $region8: #{tpu_custom_call.1} parent=1 // pred_region
      %s25 = ssub.s32 1024, 1024
      %26 = vsyncadd [#allocation6], %s25
      %s27 = sshll.u32 [#allocation5], 4
      %s28 = int_to_ptr.vmem [resolvable:$true] %s27
      %33 = dma.hbm_to_vmem [thread:$0]  %s1, 1024, %s28, [#allocation6], 64, 64, 4
    $region9: #{tpu_custom_call.1} parent=1 // pred_fallthru
      _
    // Predicated region
    $region10: #{tpu_custom_call.1} parent=1 // pred_check
      _
    $region11: #{tpu_custom_call.1} parent=1 // pred_check_branch
      %35 = sbr.rel (0) target = $region13
    $region12: #{tpu_custom_call.1} parent=1 // pred_region
      %36 = dma.done [#allocation3], 128
    $region13: #{tpu_custom_call.1} parent=1 // pred_fallthru
      _
    // Predicated region
    $region14: #{tpu_custom_call.1} parent=1 // pred_check
      _
    $region15: #{tpu_custom_call.1} parent=1 // pred_check_branch
      %38 = sbr.rel (0) target = $region17
    $region16: #{tpu_custom_call.1} parent=1 // pred_region
      %39 = dma.done [#allocation6], 1024
    $region17: #{tpu_custom_call.1} parent=1 // pred_fallthru
      _
    %v41 = vld [vmem:[#allocation2] sm:$0xff]
    %v42 = vlaneseq
    %v43 = vand.u32 %v42, 127
    %44 = vset.pattern.permute.xlu0 0
    %45 = vperm.xlu0 %44, %v41
    %v46 = vpop.permute.xlu0 %45
    %vm47 = vcmp.eq.s32.totalorder %v46, %v43
    %48 = vset.pattern.permute.xlu0 1
    %49 = vperm.xlu0 %48, %v41
    %v50 = vpop.permute.xlu0 %49
    %vm51 = vcmp.eq.s32.totalorder %v50, %v43
    %vm52 = vmor %vm47, %vm51
    %53 = vset.pattern.permute.xlu0 2
    %54 = vperm.xlu0 %53, %v41
    %v55 = vpop.permute.xlu0 %54
    %vm56 = vcmp.eq.s32.totalorder %v55, %v43
    %vm57 = vmor %vm52, %vm56
    %v58 = vsel %vm57, 1, 0
    %v59 = vcvt.s32.f32 %v58
    %v60 = vpack.c.bf16 %v59, %v59
    %v61 = vld [vmem:[#allocation5] sm:$0xf]
    %v62 = vld [vmem:[#allocation5 + $0x4] sm:$0xf]
    %v63 = vld [vmem:[#allocation5 + $0x8] sm:$0xf]
    %v64 = vld [vmem:[#allocation5 + $0xc] sm:$0xf]
    %v65 = vld [vmem:[#allocation5 + $0x10] sm:$0xf]
    %v66 = vld [vmem:[#allocation5 + $0x14] sm:$0xf]
    %v67 = vld [vmem:[#allocation5 + $0x18] sm:$0xf]
    %v68 = vld [vmem:[#allocation5 + $0x1c] sm:$0xf]
    %v69 = vld [vmem:[#allocation5 + $0x20] sm:$0xf]
    %v70 = vld [vmem:[#allocation5 + $0x24] sm:$0xf]
    %v71 = vld [vmem:[#allocation5 + $0x28] sm:$0xf]
    %v72 = vld [vmem:[#allocation5 + $0x2c] sm:$0xf]
    %v73 = vld [vmem:[#allocation5 + $0x30] sm:$0xf]
    %v74 = vld [vmem:[#allocation5 + $0x34] sm:$0xf]
    %v75 = vld [vmem:[#allocation5 + $0x38] sm:$0xf]
    %v76 = vld [vmem:[#allocation5 + $0x3c] sm:$0xf]
    %v93 = vunpack.c.l.b16 %v61
    %v94 = vunpack.c.l.b16 %v62
    %v95 = vunpack.c.l.b16 %v63
    %v96 = vunpack.c.l.b16 %v64
    %v97 = vunpack.c.l.b16 %v65
    %v98 = vunpack.c.l.b16 %v66
    %v99 = vunpack.c.l.b16 %v67
    %v100 = vunpack.c.l.b16 %v68
    %v101 = vunpack.c.l.b16 %v69
    %v102 = vunpack.c.l.b16 %v70
    %v103 = vunpack.c.l.b16 %v71
    %v104 = vunpack.c.l.b16 %v72
    %v105 = vunpack.c.l.b16 %v73
    %v106 = vunpack.c.l.b16 %v74
    %v107 = vunpack.c.l.b16 %v75
    %v108 = vunpack.c.l.b16 %v76
    %v109 = vpack.c.b16 %v94, %v93
    %v110 = vpack.c.b16 %v96, %v95
    %v111 = vpack.c.b16 %v98, %v97
    %v112 = vpack.c.b16 %v100, %v99
    %v113 = vpack.c.b16 %v102, %v101
    %v114 = vpack.c.b16 %v104, %v103
    %v115 = vpack.c.b16 %v106, %v105
    %v116 = vpack.c.b16 %v108, %v107
    %125 = vmatprep.subr.bf16.mxu0 0
    %126 = vmatpush1.bf16.msra.mxu0 %v109
    %127 = vmatprep.subr.bf16.mxu0 0
    %128 = vmatpush1.bf16.msra.mxu0 %v110
    %129 = vmatprep.subr.bf16.mxu0 0
    %130 = vmatpush1.bf16.msra.mxu0 %v111
    %131 = vmatprep.subr.bf16.mxu0 0
    %132 = vmatpush1.bf16.msra.mxu0 %v112
    %133 = vmatprep.subr.bf16.mxu0 0
    %134 = vmatpush1.bf16.msra.mxu0 %v113
    %135 = vmatprep.subr.bf16.mxu0 0
    %136 = vmatpush1.bf16.msra.mxu0 %v114
    %137 = vmatprep.subr.bf16.mxu0 0
    %138 = vmatpush1.bf16.msra.mxu0 %v115
    %139 = vmatprep.subr.bf16.mxu0 0
    %140 = vmatpush1.bf16.msra.mxu0 %v116
    %141 = vmatprep.subr.bf16.mxu0 0
    %142 = vmatpush1.bf16.msra.mxu0 0
    %143 = vmatprep.subr.bf16.mxu0 0
    %144 = vmatpush1.bf16.msra.mxu0 0
    %145 = vmatprep.subr.bf16.mxu0 0
    %146 = vmatpush1.bf16.msra.mxu0 0
    %147 = vmatprep.subr.bf16.mxu0 0
    %148 = vmatpush1.bf16.msra.mxu0 0
    %149 = vmatprep.subr.bf16.mxu0 0
    %150 = vmatpush1.bf16.msra.mxu0 0
    %151 = vmatprep.subr.bf16.mxu0 0
    %152 = vmatpush1.bf16.msra.mxu0 0
    %153 = vmatprep.subr.bf16.mxu0 0
    %154 = vmatpush1.bf16.msra.mxu0 0
    %155 = vmatprep.subr.bf16.mxu0 0
    %156 = vmatpush1.bf16.msra.mxu0 0
    %157 = vmatprep.mubr.bf16.mxu0 0
    %158 = vmatmul.mubr.bf16.gmra.mrb[0].mxu0 %v60
    %v159 = vpop.f32.mrb[0].mxu0
    %v160 = vadd.f32 0.0, %v159
    %v161 = vpop.f32.mrb[0].mxu0
    %v162 = vpop.f32.mrb[0].mxu0
    %v163 = vpop.f32.mrb[0].mxu0
    %164 = vdwg.mxu0
    %v165 = vmul.f32 %v160, 0.5
    %v166 = vtanh.pop %v165
    %v167 = vmul.f32 %v166, 0.5
    %v168 = vadd.f32 %v167, 0.5
    %169 = vst [vmem:[#allocation7] sm:$0xff] %v168
    // Predicated region
    $region18: #{tpu_custom_call.1} parent=1 // pred_check
      _
    $region19: #{tpu_custom_call.1} parent=1 // pred_check_branch
      %171 = sbr.rel (0) target = $region21
    $region20: #{tpu_custom_call.1} parent=1 // pred_region
      %s173 = ssub.s32 128, 32
      %174 = vsyncadd [#allocation4], %s173
      %s175 = sshll.u32 [#allocation7], 4
      %s176 = int_to_ptr.vmem [resolvable:$true] %s175
      %181 = dma.vmem_to_hbm [thread:$0]  %s176, 32, %s2, [#allocation4], 32, 32, 2
    $region21: #{tpu_custom_call.1} parent=1 // pred_fallthru
      _
    // Predicated region
    $region22: #{tpu_custom_call.1} parent=1 // pred_check
      _
    $region23: #{tpu_custom_call.1} parent=1 // pred_check_branch
      %183 = sbr.rel (0) target = $region25
    $region24: #{tpu_custom_call.1} parent=1 // pred_region
      %184 = dma.done [#allocation4], 128
    $region25: #{tpu_custom_call.1} parent=1 // pred_fallthru
      _
    %185 = vsyncpa [#allocation3], 1
    %186 = vsyncpa [#allocation6], 1
    %187 = vsyncpa [#allocation4], 1

</llo_original>
